<compile_context>
chip_gen: v6e
topology: v6e:2x2x1
jax: 0.10.0
libtpu: 0.0.40
codegen_flags: <defaults>
</compile_context>

<pallas_src>
import functools

import jax
import jax.numpy as jnp
import numpy as np
from jax.experimental import pallas as pl
from jax.experimental.pallas import tpu as pltpu


def _round_up(x, m):
    return (x + m - 1) // m * m


def _time_encoder_kernel(t_ref, w_ref, o_ref, *, tlen, row_off, k_pad):
    """t_ref: (TILE_N, tdim) int32, w_ref: (K_pad, total_d) f32,
    o_ref: (TILE_N, total_d) f32."""
    tile_n = o_ref.shape[0]
    classes = jax.lax.broadcasted_iota(jnp.int32, (tile_n, k_pad), 1)
    hit = None
    for i in range(len(tlen)):                         # tdim is tiny -> unrolled
        # Clamp (out-of-range safety) + shift into feature i's row range.
        t_i = jnp.clip(t_ref[:, i:i + 1], 0, tlen[i] - 1) + row_off[i]  # (TILE_N, 1)
        h = t_i == classes                             # (TILE_N, K_pad) bool
        hit = h if hit is None else jnp.logical_or(hit, h)
    multi_hot = hit.astype(jnp.float32)                # one 1 per feature range
    # Block-diagonal W_big => one MXU dot yields the concatenated embedding.
    o_ref[...] = jnp.dot(multi_hot, w_ref[...],
                         preferred_element_type=jnp.float32)


def pack_weights(Ws, total_d):
    """One-time parameter preprocessing: block-diagonal (K_pad, total_d) slab."""
    tlen = tuple(int(w.shape[0]) for w in Ws)
    dims = tuple(int(w.shape[1]) for w in Ws)
    assert sum(dims) == total_d, (dims, total_d)
    row_off = tuple(int(x) for x in np.concatenate([[0], np.cumsum(tlen)])[:-1])
    col_off = [int(x) for x in np.concatenate([[0], np.cumsum(dims)])[:-1]]
    k_pad = _round_up(max(sum(tlen), 1), 128)          # full MXU K width
    W_big = np.zeros((k_pad, total_d), np.float32)
    for i, W in enumerate(Ws):
        W_big[row_off[i]:row_off[i] + tlen[i],
              col_off[i]:col_off[i] + dims[i]] = np.asarray(W, np.float32)
    return jnp.asarray(W_big), tlen, row_off, k_pad


def time_encoder_forward(T, W_big, tlen, row_off, k_pad, total_d, tile_n=512):
    """T: (N, tdim) integer -> (N, total_d) f32, matching TimeEncoder.forward."""
    N, tdim = T.shape
    assert tdim == len(tlen)
    tile_n = min(tile_n, _round_up(N, 8))              # sublane-aligned tiles
    n_pad = _round_up(N, tile_n)
    t = T.astype(jnp.int32)
    if n_pad != N:
        t = jnp.pad(t, ((0, n_pad - N), (0, 0)))       # pad rows sliced off below

    out = pl.pallas_call(
        functools.partial(_time_encoder_kernel,
                          tlen=tlen, row_off=row_off, k_pad=k_pad),
        out_shape=jax.ShapeDtypeStruct((n_pad, total_d), jnp.float32),
        grid=(n_pad // tile_n,),
        in_specs=[
            # indices: one (TILE_N, tdim) block per grid step
            pl.BlockSpec((tile_n, tdim), lambda i: (i, 0)),
            # packed weights: same block every step -> stays VMEM-resident
            pl.BlockSpec((k_pad, total_d), lambda i: (0, 0)),
        ],
        out_specs=pl.BlockSpec((tile_n, total_d), lambda i: (i, 0)),
        compiler_params=pltpu.CompilerParams(
            dimension_semantics=("parallel",)),        # v7x: shard N tiles on 2 TCs
    )(t, W_big)
    return out[:N]


def make_params(total_d, tdim, tlen, key):
    """Deterministic xavier-normal init matching TimeEncoder.__init__."""
    d = total_d // tdim
    Ws = []
    for i in range(tdim):
        if i == tdim - total_d % tdim:
            d += 1
        key, sub = jax.random.split(key)
        std = (2.0 / (tlen[i] + d)) ** 0.5             # xavier_normal_ gain=1
        Ws.append(jax.random.normal(sub, (tlen[i], d), jnp.float32) * std)
    return Ws


if __name__ == "__main__":
    total_d, tdim = 32, 3
    tlen = [7, 12, 24]      # e.g. day-of-week, month, hour
    N = 16

    key = jax.random.PRNGKey(0)
    key, pkey, tkey = jax.random.split(key, 3)

    Ws = make_params(total_d, tdim, tlen, pkey)
    W_big, tlen_t, row_off, k_pad = pack_weights(Ws, total_d)

    T = jnp.stack(
        [jax.random.randint(jax.random.fold_in(tkey, i), (N,), 0, tlen[i],
                            dtype=jnp.int32) for i in range(tdim)],
        axis=1)                                        # (N, tdim) int32

    t_emb = time_encoder_forward(T, W_big, tlen_t, row_off, k_pad, total_d)
    t_emb = jax.block_until_ready(t_emb)
    assert t_emb.shape == (N, total_d), t_emb.shape

    # Reference: one_hot @ W_i == row gather of W_i, concatenated.
    ref = jnp.concatenate([Ws[i][T[:, i]] for i in range(tdim)], axis=-1)
    assert np.allclose(np.asarray(t_emb), np.asarray(ref), atol=1e-5)

    print("KERNEL_OK")
</pallas_src>

<mosaic_0001>
module attributes {stable_mosaic.version = 11 : i64} {
  func.func @_time_encoder_kernel(%arg0: i32, %arg1: memref<16x3xi32, #tpu.memory_space<vmem>>, %arg2: memref<128x32xf32, #tpu.memory_space<vmem>>, %arg3: memref<16x32xf32, #tpu.memory_space<vmem>>) attributes {dimension_semantics = [#tpu.dimension_semantics<parallel>], iteration_bounds = array<i64: 1>, scalar_prefetch = 0 : i64, scratch_operands = 0 : i64, tpu.core_type = #tpu.core_type<tc>, window_params = [{transform_indices = @transform_0, window_bounds = array<i64: 16, 3>}, {pipeline_mode = #tpu.pipeline_mode<synchronous>, transform_indices = @transform_1, window_bounds = array<i64: 128, 32>}, {transform_indices = @transform_2, window_bounds = array<i64: 16, 32>}]} {
    %0 = tpu.iota {dimensions = array<i32: 1>} : vector<16x128xi32>
    %c0 = arith.constant 0 : index
    %c0_0 = arith.constant 0 : index
    %1 = vector.load %arg1[%c0, %c0_0] : memref<16x3xi32, #tpu.memory_space<vmem>>, vector<16x1xi32>
    %c0_i32 = arith.constant 0 : i32
    %c6_i32 = arith.constant 6 : i32
    %2 = vector.broadcast %c0_i32 : i32 to vector<16x1xi32>
    %3 = arith.maxsi %2, %1 : vector<16x1xi32>
    %4 = vector.broadcast %c6_i32 : i32 to vector<16x1xi32>
    %5 = arith.minsi %4, %3 : vector<16x1xi32>
    %c0_i32_1 = arith.constant 0 : i32
    %6 = vector.broadcast %c0_i32_1 : i32 to vector<16x1xi32>
    %7 = arith.addi %5, %6 : vector<16x1xi32>
    %8 = vector.broadcast %7 : vector<16x1xi32> to vector<16x128xi32>
    %9 = arith.cmpi eq, %8, %0 : vector<16x128xi32>
    %c0_2 = arith.constant 0 : index
    %c1 = arith.constant 1 : index
    %10 = vector.load %arg1[%c0_2, %c1] : memref<16x3xi32, #tpu.memory_space<vmem>>, vector<16x1xi32>
    %c0_i32_3 = arith.constant 0 : i32
    %c11_i32 = arith.constant 11 : i32
    %11 = vector.broadcast %c0_i32_3 : i32 to vector<16x1xi32>
    %12 = arith.maxsi %11, %10 : vector<16x1xi32>
    %13 = vector.broadcast %c11_i32 : i32 to vector<16x1xi32>
    %14 = arith.minsi %13, %12 : vector<16x1xi32>
    %c7_i32 = arith.constant 7 : i32
    %15 = vector.broadcast %c7_i32 : i32 to vector<16x1xi32>
    %16 = arith.addi %14, %15 : vector<16x1xi32>
    %17 = vector.broadcast %16 : vector<16x1xi32> to vector<16x128xi32>
    %18 = arith.cmpi eq, %17, %0 : vector<16x128xi32>
    %19 = arith.ori %9, %18 : vector<16x128xi1>
    %c0_4 = arith.constant 0 : index
    %c2 = arith.constant 2 : index
    %20 = vector.load %arg1[%c0_4, %c2] : memref<16x3xi32, #tpu.memory_space<vmem>>, vector<16x1xi32>
    %c0_i32_5 = arith.constant 0 : i32
    %c23_i32 = arith.constant 23 : i32
    %21 = vector.broadcast %c0_i32_5 : i32 to vector<16x1xi32>
    %22 = arith.maxsi %21, %20 : vector<16x1xi32>
    %23 = vector.broadcast %c23_i32 : i32 to vector<16x1xi32>
    %24 = arith.minsi %23, %22 : vector<16x1xi32>
    %c19_i32 = arith.constant 19 : i32
    %25 = vector.broadcast %c19_i32 : i32 to vector<16x1xi32>
    %26 = arith.addi %24, %25 : vector<16x1xi32>
    %27 = vector.broadcast %26 : vector<16x1xi32> to vector<16x128xi32>
    %28 = arith.cmpi eq, %27, %0 : vector<16x128xi32>
    %29 = arith.ori %19, %28 : vector<16x128xi1>
    %30 = arith.extui %29 : vector<16x128xi1> to vector<16x128xi32>
    %31 = arith.sitofp %30 : vector<16x128xi32> to vector<16x128xf32>
    %c0_6 = arith.constant 0 : index
    %c0_7 = arith.constant 0 : index
    %32 = vector.load %arg2[%c0_6, %c0_7] : memref<128x32xf32, #tpu.memory_space<vmem>>, vector<128x32xf32>
    %cst = arith.constant dense<0.000000e+00> : vector<16x32xf32>
    %33 = tpu.matmul %31, %32, %cst {dimension_numbers = #tpu.dot_dimension_numbers<[1], [0], [0], [1], [0, 0, 1, 1], [], []>} : vector<16x128xf32>, vector<128x32xf32>, vector<16x32xf32> -> vector<16x32xf32>
    %c0_8 = arith.constant 0 : index
    %c0_9 = arith.constant 0 : index
    %34 = vector.load %arg3[%c0_8, %c0_9] : memref<16x32xf32, #tpu.memory_space<vmem>>, vector<16x32xf32>
    tpu.vector_store %arg3[%c0_8, %c0_9], %33 {strides = array<i32>} : memref<16x32xf32, #tpu.memory_space<vmem>>, vector<16x32xf32>,
    return
  }
  func.func @transform_0(%arg0: i32) -> (i32, i32) {
    %c0_i32 = arith.constant 0 : i32
    %c0_i32_0 = arith.constant 0 : i32
    return %arg0, %c0_i32 : i32, i32
  }
  func.func @transform_1(%arg0: i32) -> (i32, i32) {
    %c0_i32 = arith.constant 0 : i32
    %c0_i32_0 = arith.constant 0 : i32
    %c0_i32_1 = arith.constant 0 : i32
    return %c0_i32, %c0_i32_0 : i32, i32
  }
  func.func @transform_2(%arg0: i32) -> (i32, i32) {
    %c0_i32 = arith.constant 0 : i32
    %c0_i32_0 = arith.constant 0 : i32
    return %arg0, %c0_i32 : i32, i32
  }
}

</mosaic_0001>

<llo_original>
// kernel: tpu_custom_call.1
$region0: #{tpu_custom_call.1}
  #allocation0 [shape = 'u32[]', space=smem, size = 0x4, offset = 0x4, fixed_abs, tag = 'smem constant byte address 0x4 - core index']
  #allocation1 [shape = 'u32[144,128]{1,0:T(1,128)}', space=vmem, size = 0x12000, scoped, tag = 'internal scratch']
  %s0 = inlined_call_operand.vmem [shape: s32[16,3], index: 0, kind: input, shape index: {}]
  %s1 = inlined_call_operand.vmem [shape: f32[128,32], index: 1, kind: input, shape index: {}]
  %s2 = inlined_call_operand.hbm [shape: f32[16,32], index: 2, kind: output, shape index: {}]
  %s3 = sld [smem:[#allocation0]]
  $region18: #{tpu_custom_call.1} parent=0
    _
  %s5 = ssub.s32 1, %s3
  %s6 = scalar_select 0, %s5, %s3
  $region1: #{tpu_custom_call.1} parent=0
    #allocation2 [shape = 'u8[8192]{0}', space=vmem, size = 0x2000, scoped, tag = 'output window, operand 0, single buffered']
    #allocation3 [shape = 's32[1]{0}', space=sflag, size = 0x4, scoped, tag = 'scoped memory for tpu_custom_call.1']
    %7 = vsyncpa [#allocation3], 0
    // Predicated region
    $region2: #{tpu_custom_call.1} parent=1 // pred_check
      _
    $region3: #{tpu_custom_call.1} parent=1 // pred_check_branch
      %9 = sbr.rel (0) target = $region5
    $region4: #{tpu_custom_call.1} parent=1 // pred_region
      _
    $region5: #{tpu_custom_call.1} parent=1 // pred_fallthru
      _
    // Predicated region
    $region6: #{tpu_custom_call.1} parent=1 // pred_check
      _
    $region7: #{tpu_custom_call.1} parent=1 // pred_check_branch
      %11 = sbr.rel (0) target = $region9
    $region8: #{tpu_custom_call.1} parent=1 // pred_region
      _
    $region9: #{tpu_custom_call.1} parent=1 // pred_fallthru
      _
    %v12 = vlaneseq
    %v13 = vand.u32 %v12, 127
    %v14 = vld [vmem:[%s0] sm:$0xff]
    %v15 = vld [vmem:[%s0 + $0x8] sm:$0xff]
    %vm16 = vcmp.gt.s32.totalorder %v14, 0
    %v17 = vsel %vm16, %v14, 0
    %vm18 = vcmp.gt.s32.totalorder %v15, 0
    %v19 = vsel %vm18, %v15, 0
    %vm20 = vcmp.lt.s32.totalorder %v17, 6
    %v21 = vsel %vm20, %v17, 6
    %vm22 = vcmp.lt.s32.totalorder %v19, 6
    %v23 = vsel %vm22, %v19, 6
    %24 = vset.pattern.permute.xlu0 0
    %25 = vperm.xlu0 %24, %v21
    %v26 = vpop.permute.xlu0 %25
    %27 = vset.pattern.permute.xlu0 0
    %28 = vperm.xlu0 %27, %v23
    %v29 = vpop.permute.xlu0 %28
    %vm30 = vcmp.eq.s32.totalorder %v26, %v13
    %vm31 = vcmp.eq.s32.totalorder %v29, %v13
    %vm32 = vcmp.lt.s32.totalorder %v17, 11
    %v33 = vsel %vm32, %v17, 11
    %vm34 = vcmp.lt.s32.totalorder %v19, 11
    %v35 = vsel %vm34, %v19, 11
    %v36 = vadd.s32 %v33, 7
    %v37 = vadd.s32 %v35, 7
    %38 = vset.pattern.permute.xlu0 1
    %39 = vperm.xlu0 %38, %v36
    %v40 = vpop.permute.xlu0 %39
    %41 = vset.pattern.permute.xlu0 1
    %42 = vperm.xlu0 %41, %v37
    %v43 = vpop.permute.xlu0 %42
    %vm44 = vcmp.eq.s32.totalorder %v40, %v13
    %vm45 = vcmp.eq.s32.totalorder %v43, %v13
    %vm46 = vmor %vm30, %vm44
    %vm47 = vmor %vm31, %vm45
    %vm48 = vcmp.lt.s32.totalorder %v17, 23
    %v49 = vsel %vm48, %v17, 23
    %vm50 = vcmp.lt.s32.totalorder %v19, 23
    %v51 = vsel %vm50, %v19, 23
    %v52 = vadd.s32 %v49, 19
    %v53 = vadd.s32 %v51, 19
    %54 = vset.pattern.permute.xlu0 2
    %55 = vperm.xlu0 %54, %v52
    %v56 = vpop.permute.xlu0 %55
    %57 = vset.pattern.permute.xlu0 2
    %58 = vperm.xlu0 %57, %v53
    %v59 = vpop.permute.xlu0 %58
    %vm60 = vcmp.eq.s32.totalorder %v56, %v13
    %vm61 = vcmp.eq.s32.totalorder %v59, %v13
    %vm62 = vmor %vm46, %vm60
    %vm63 = vmor %vm47, %vm61
    %v64 = vsel %vm62, 1, 0
    %v65 = vsel %vm63, 1, 0
    %v66 = vcvt.s32.f32 %v64
    %v67 = vcvt.s32.f32 %v65
    %v68 = vld [vmem:[%s1] sm:$0xff]
    %v69 = vld [vmem:[%s1 + $0x8] sm:$0xff]
    %v70 = vld [vmem:[%s1 + $0x10] sm:$0xff]
    %v71 = vld [vmem:[%s1 + $0x18] sm:$0xff]
    %v72 = vld [vmem:[%s1 + $0x20] sm:$0xff]
    %v73 = vld [vmem:[%s1 + $0x28] sm:$0xff]
    %v74 = vld [vmem:[%s1 + $0x30] sm:$0xff]
    %v75 = vld [vmem:[%s1 + $0x38] sm:$0xff]
    %v76 = vld [vmem:[%s1 + $0x40] sm:$0xff]
    %v77 = vld [vmem:[%s1 + $0x48] sm:$0xff]
    %v78 = vld [vmem:[%s1 + $0x50] sm:$0xff]
    %v79 = vld [vmem:[%s1 + $0x58] sm:$0xff]
    %v80 = vld [vmem:[%s1 + $0x60] sm:$0xff]
    %v81 = vld [vmem:[%s1 + $0x68] sm:$0xff]
    %v82 = vld [vmem:[%s1 + $0x70] sm:$0xff]
    %v83 = vld [vmem:[%s1 + $0x78] sm:$0xff]
    %84 = vmatprep.subr.mxu0 0.0
    %85 = vmatpush1.msra.mxu0 %v83
    %86 = vmatprep.subr.mxu0 0.0
    %87 = vmatpush1.msra.mxu0 %v82
    %88 = vmatprep.subr.mxu0 0.0
    %89 = vmatpush1.msra.mxu0 %v81
    %90 = vmatprep.subr.mxu0 0.0
    %91 = vmatpush1.msra.mxu0 %v80
    %92 = vmatprep.subr.mxu0 0.0
    %93 = vmatpush1.msra.mxu0 %v79
    %94 = vmatprep.subr.mxu0 0.0
    %95 = vmatpush1.msra.mxu0 %v78
    %96 = vmatprep.subr.mxu0 0.0
    %97 = vmatpush1.msra.mxu0 %v77
    %98 = vmatprep.subr.mxu0 0.0
    %99 = vmatpush1.msra.mxu0 %v76
    %100 = vmatprep.subr.mxu0 0.0
    %101 = vmatpush1.msra.mxu0 %v75
    %102 = vmatprep.subr.mxu0 0.0
    %103 = vmatpush1.msra.mxu0 %v74
    %104 = vmatprep.subr.mxu0 0.0
    %105 = vmatpush1.msra.mxu0 %v73
    %106 = vmatprep.subr.mxu0 0.0
    %107 = vmatpush1.msra.mxu0 %v72
    %108 = vmatprep.subr.mxu0 0.0
    %109 = vmatpush1.msra.mxu0 %v71
    %110 = vmatprep.subr.mxu0 0.0
    %111 = vmatpush1.msra.mxu0 %v70
    %112 = vmatprep.subr.mxu0 0.0
    %113 = vmatpush1.msra.mxu0 %v69
    %114 = vmatprep.subr.mxu0 0.0
    %115 = vmatpush1.msra.mxu0 %v68
    %116 = vmatprep.subr.mxu0 0.0
    %117 = vmatpush2.msra.mxu0 0.0
    %118 = vmatprep.subr.mxu0 0.0
    %119 = vmatpush2.msra.mxu0 0.0
    %120 = vmatprep.subr.mxu0 0.0
    %121 = vmatpush2.msra.mxu0 0.0
    %122 = vmatprep.subr.mxu0 0.0
    %123 = vmatpush2.msra.mxu0 0.0
    %124 = vmatprep.subr.mxu0 0.0
    %125 = vmatpush2.msra.mxu0 0.0
    %126 = vmatprep.subr.mxu0 0.0
    %127 = vmatpush2.msra.mxu0 0.0
    %128 = vmatprep.subr.mxu0 0.0
    %129 = vmatpush2.msra.mxu0 0.0
    %130 = vmatprep.subr.mxu0 0.0
    %131 = vmatpush2.msra.mxu0 0.0
    %132 = vmatprep.subr.mxu0 0.0
    %133 = vmatpush2.msra.mxu0 0.0
    %134 = vmatprep.subr.mxu0 0.0
    %135 = vmatpush2.msra.mxu0 0.0
    %136 = vmatprep.subr.mxu0 0.0
    %137 = vmatpush2.msra.mxu0 0.0
    %138 = vmatprep.subr.mxu0 0.0
    %139 = vmatpush2.msra.mxu0 0.0
    %140 = vmatprep.subr.mxu0 0.0
    %141 = vmatpush2.msra.mxu0 0.0
    %142 = vmatprep.subr.mxu0 0.0
    %143 = vmatpush2.msra.mxu0 0.0
    %144 = vmatprep.subr.mxu0 0.0
    %145 = vmatpush2.msra.mxu0 0.0
    %146 = vmatprep.subr.mxu0 0.0
    %147 = vmatpush2.msra.mxu0 0.0
    %148 = vmatprep.mubr.f32.mxu0 0.0
    %149 = vmatmul.mubr.f32.gmra.mxu0 %v66
    %v150 = vpop.f32.mrf.mxu0
    %v151 = vadd.f32 0.0, %v150
    %v152 = vpop.f32.mrf.mxu0
    %153 = vmatprep.mubr.f32.mxu0 0.0
    %154 = vmatmul.mubr.f32.gmra.mxu0 %v67
    %v155 = vpop.f32.mrf.mxu0
    %v156 = vadd.f32 0.0, %v155
    %v157 = vpop.f32.mrf.mxu0
    %158 = vdwg.mxu0
    %vm159 = vcmask 261120
    %160 = vst.msk [vmem:[#allocation2] sm:$0xff] %vm159, %v151
    %161 = vst.msk [vmem:[#allocation2 + $0x8] sm:$0xff] %vm159, %v156
    // Predicated region
    $region10: #{tpu_custom_call.1} parent=1 // pred_check
      _
    $region11: #{tpu_custom_call.1} parent=1 // pred_check_branch
      %163 = sbr.rel (0) target = $region13
    $region12: #{tpu_custom_call.1} parent=1 // pred_region
      %s165 = ssub.s32 256, 256
      %166 = vsyncadd [#allocation3], %s165
      %s167 = sshll.u32 [#allocation2], 4
      %s168 = int_to_ptr.vmem [resolvable:$true] %s167
      %173 = dma.vmem_to_hbm [thread:$0]  %s168, 256, %s2, [#allocation3], 128, 128, 8
    $region13: #{tpu_custom_call.1} parent=1 // pred_fallthru
      _
    // Predicated region
    $region14: #{tpu_custom_call.1} parent=1 // pred_check
      _
    $region15: #{tpu_custom_call.1} parent=1 // pred_check_branch
      %175 = sbr.rel (0) target = $region17
    $region16: #{tpu_custom_call.1} parent=1 // pred_region
      %176 = dma.done [#allocation3], 256
    $region17: #{tpu_custom_call.1} parent=1 // pred_fallthru
      _
    %177 = vsyncpa [#allocation3], 1

</llo_original>
